<compile_context>
chip_gen: v5e
topology: v5e:2x2
jax: 0.10.0
libtpu: 0.0.40
codegen_flags: <defaults>
</compile_context>

<pallas_src>
import functools
import math

import jax
import jax.numpy as jnp
from jax.experimental import pallas as pl
from jax.experimental.pallas import tpu as pltpu


# --------------------------------------------------------------------------- #
# Kernels
# --------------------------------------------------------------------------- #
def _attn_weights_kernel(q_ref, k_ref, v_ref, o_ref, w_ref, *, inv_sqrt_d,
                         mxu_dtype):
    """One (head-group, query-tile) step; emits attention weights.

    q_ref: (G, TQ, D)   k_ref, v_ref: (G, S, D)
    o_ref: (G, TQ, D)   w_ref: (G, TQ, S)
    """
    # Fold 1/sqrt(d_head) into q: TQ*D multiplies instead of TQ*S.
    q = q_ref[...]
    q = (q * jnp.asarray(inv_sqrt_d, dtype=q.dtype)).astype(mxu_dtype)
    k = k_ref[...].astype(mxu_dtype)
    v = v_ref[...]

    # scores = q @ k^T, contracting the D axis directly (no k transpose).
    s = jnp.einsum("gqd,gkd->gqk", q, k, preferred_element_type=jnp.float32)

    # Numerically stable softmax over keys.  Exact normalization here because
    # the weights are returned to the caller (must match F.softmax).
    s = s - jnp.max(s, axis=-1, keepdims=True)
    p = jnp.exp(s)
    p = p / jnp.sum(p, axis=-1, keepdims=True)

    w_ref[...] = p.astype(w_ref.dtype)

    o = jnp.einsum("gqk,gkd->gqd", p.astype(mxu_dtype), v.astype(mxu_dtype),
                   preferred_element_type=jnp.float32)
    o_ref[...] = o.astype(o_ref.dtype)


def _flash_kernel(q_ref, k_ref, v_ref, o_ref, m_sc, l_sc, acc_sc, *,
                  inv_sqrt_d, mxu_dtype):
    """Key-tiled online-softmax step (no weights output).

    q_ref: (G, TQ, D)   k_ref, v_ref: (G, TK, D)   o_ref: (G, TQ, D)
    scratch: m_sc,l_sc (G, TQ, 1) f32 ; acc_sc (G, TQ, D) f32
    """
    kv = pl.program_id(2)

    @pl.when(kv == 0)
    def _():
        m_sc[...] = jnp.full_like(m_sc, -jnp.inf)
        l_sc[...] = jnp.zeros_like(l_sc)
        acc_sc[...] = jnp.zeros_like(acc_sc)

    q = q_ref[...]
    q = (q * jnp.asarray(inv_sqrt_d, dtype=q.dtype)).astype(mxu_dtype)
    k = k_ref[...].astype(mxu_dtype)
    v = v_ref[...]

    s = jnp.einsum("gqd,gkd->gqk", q, k, preferred_element_type=jnp.float32)

    m_prev = m_sc[...]
    m_new = jnp.maximum(m_prev, jnp.max(s, axis=-1, keepdims=True))
    alpha = jnp.exp(m_prev - m_new)
    p = jnp.exp(s - m_new)

    l_sc[...] = alpha * l_sc[...] + jnp.sum(p, axis=-1, keepdims=True)
    acc_sc[...] = alpha * acc_sc[...] + jnp.einsum(
        "gqk,gkd->gqd", p.astype(mxu_dtype), v.astype(mxu_dtype),
        preferred_element_type=jnp.float32)
    m_sc[...] = m_new

    @pl.when(kv == pl.num_programs(2) - 1)
    def _():
        o_ref[...] = (acc_sc[...]
                      * pl.reciprocal(l_sc[...], approx=True)).astype(o_ref.dtype)


# --------------------------------------------------------------------------- #
# Sizing helpers
# --------------------------------------------------------------------------- #
def _pad(n, m):
    return ((n + m - 1) // m) * m


def _pick_tile(total, target, multiple):
    """Largest divisor of `total` that is a multiple of `multiple` and <= target.
    Falls back to `total` (full-extent block) when no such divisor exists."""
    best = None
    for cand in range(multiple, min(target, total) + 1, multiple):
        if total % cand == 0:
            best = cand
    return best if best is not None else total


def _vmem_capacity_bytes():
    try:
        info = pltpu.get_tpu_info()
        cap = getattr(info, "vmem_capacity_bytes", None)
        if cap:
            return int(cap)
    except Exception:
        pass
    return 64 << 20  # conservative (v7x per-TensorCore)


def _weights_block_bytes(G, TQ, S, D, sub, in_isz, w_isz):
    """Approx per-step VMEM residency for the weights path (double-buffered
    BlockSpec buffers + f32 intermediates), including lane padding for D<128."""
    Dp = _pad(D, 128)
    Sp = _pad(S, 128)
    TQp = _pad(TQ, sub)
    Ssub = _pad(S, sub)
    qo = 2 * 2 * G * TQp * Dp * in_isz            # q + o blocks (x2 buffers)
    kv = 2 * 2 * G * Ssub * Dp * in_isz           # k + v blocks (x2 buffers)
    w = 2 * G * TQp * Sp * w_isz                  # weights block (x2 buffers)
    inter = G * TQp * Sp * (3 * 4 + in_isz)       # f32 scores/probs/temps + cast
    return qo + kv + w + inter


def _flash_block_bytes(G, TQ, TK, D, sub, in_isz):
    Dp = _pad(D, 128)
    TKp = _pad(TK, 128)
    TQp = _pad(TQ, sub)
    TKsub = _pad(TK, sub)
    qo = 2 * 2 * G * TQp * Dp * in_isz
    kv = 2 * 2 * G * TKsub * Dp * in_isz
    scratch = G * TQp * (Dp + 2 * 128) * 4        # acc + m + l (f32)
    inter = G * TQp * TKp * (3 * 4 + in_isz)
    return qo + kv + scratch + inter


# --------------------------------------------------------------------------- #
# Wrapper
# --------------------------------------------------------------------------- #
def scaled_dot_product_attention(q, k, v, *, q_tile=128, k_tile=512,
                                 return_weights=True, mxu_dtype=None):
    """q, k, v: (B, H, S, D).

    return_weights=True  -> (out (B,H,S,D), attn_weights (B,H,S,S))  [module path]
    return_weights=False -> out only, via the key-tiled online-softmax fast path.
    mxu_dtype: optional matmul operand dtype (e.g. jnp.bfloat16 for f32 inputs);
    accumulation is always f32.
    """
    B, H, S, D = q.shape
    assert k.shape == (B, H, S, D) and v.shape == (B, H, S, D)
    BH = B * H

    in_dt = jnp.dtype(q.dtype)
    itemsize = in_dt.itemsize
    sub = max(8, 32 // itemsize)                 # sublane packing per dtype
    mxu_dt = jnp.dtype(mxu_dtype) if mxu_dtype is not None else in_dt

    # Group heads per grid step when D < 128 lanes; G is a power of 2 | BH.
    G = math.gcd(max(1, 128 // D), BH)

    TQ = _pick_tile(S, q_tile, sub)

    vmem_cap = _vmem_capacity_bytes()
    budget = int(0.70 * vmem_cap)
    vmem_ceiling = max(int(0.75 * vmem_cap), 32 << 20)

    inv_sqrt_d = 1.0 / math.sqrt(D)
    qf = q.reshape(BH, S, D)
    kf = k.reshape(BH, S, D)
    vf = v.reshape(BH, S, D)

    if return_weights:
        # ------------------ weights path (module semantics) ------------------
        w_dt = in_dt                              # F.softmax preserves dtype
        # Auto-shrink TQ / G to fit the per-generation VMEM budget.
        while _weights_block_bytes(G, TQ, S, D, sub, itemsize, w_dt.itemsize) > budget:
            if TQ > sub and (TQ // 2) % sub == 0 and S % (TQ // 2) == 0:
                TQ //= 2
            elif G > 1:
                G //= 2
            else:
                break  # weights are O(S^2); very long S belongs on the flash path
        NG = BH // G
        n_qt = S // TQ

        kernel = functools.partial(_attn_weights_kernel,
                                   inv_sqrt_d=inv_sqrt_d, mxu_dtype=mxu_dt)

        q_spec = pl.BlockSpec((G, TQ, D), lambda g, t: (g, t, 0))
        kv_spec = pl.BlockSpec((G, S, D), lambda g, t: (g, 0, 0))
        o_spec = pl.BlockSpec((G, TQ, D), lambda g, t: (g, t, 0))
        w_spec = pl.BlockSpec((G, TQ, S), lambda g, t: (g, t, 0))

        block_bytes = _weights_block_bytes(G, TQ, S, D, sub, itemsize, w_dt.itemsize)
        vmem_limit = int(min(max(block_bytes + (8 << 20), 32 << 20), vmem_ceiling))

        cost = pl.CostEstimate(
            flops=int(4 * BH * S * S * D),
            transcendentals=int(BH * S * S),
            bytes_accessed=int(itemsize * 4 * BH * S * D
                               + w_dt.itemsize * BH * S * S))

        out, attn = pl.pallas_call(
            kernel,
            out_shape=(jax.ShapeDtypeStruct((BH, S, D), in_dt),
                       jax.ShapeDtypeStruct((BH, S, S), w_dt)),
            grid_spec=pltpu.PrefetchScalarGridSpec(
                num_scalar_prefetch=0,
                grid=(NG, n_qt),
                in_specs=[q_spec, kv_spec, kv_spec],
                out_specs=(o_spec, w_spec),
            ),
            compiler_params=pltpu.CompilerParams(
                # Pin megacore sharding to the head-group axis so both v7x cores
                # keep the "K/V block constant over t" reuse (no double DMA).
                dimension_semantics=("parallel", "arbitrary"),
                vmem_limit_bytes=vmem_limit,
            ),
            cost_estimate=cost,
        )(qf, kf, vf)
        return out.reshape(B, H, S, D), attn.reshape(B, H, S, S)

    # ----------------- no-weights fast path: online softmax ------------------
    TK = _pick_tile(S, k_tile, sub)
    while _flash_block_bytes(G, TQ, TK, D, sub, itemsize) > budget:
        if TK > sub and (TK // 2) % sub == 0 and S % (TK // 2) == 0:
            TK //= 2
        elif TQ > sub and (TQ // 2) % sub == 0 and S % (TQ // 2) == 0:
            TQ //= 2
        elif G > 1:
            G //= 2
        else:
            break
    NG = BH // G
    n_qt = S // TQ
    n_kt = S // TK

    kernel = functools.partial(_flash_kernel, inv_sqrt_d=inv_sqrt_d,
                               mxu_dtype=mxu_dt)

    q_spec = pl.BlockSpec((G, TQ, D), lambda g, t, c: (g, t, 0))
    kv_spec = pl.BlockSpec((G, TK, D), lambda g, t, c: (g, c, 0))
    o_spec = pl.BlockSpec((G, TQ, D), lambda g, t, c: (g, t, 0))

    block_bytes = _flash_block_bytes(G, TQ, TK, D, sub, itemsize)
    vmem_limit = int(min(max(block_bytes + (8 << 20), 32 << 20), vmem_ceiling))

    cost = pl.CostEstimate(
        flops=int(4 * BH * S * S * D),
        transcendentals=int(BH * S * S),
        bytes_accessed=int(itemsize * 4 * BH * S * D))

    out = pl.pallas_call(
        kernel,
        out_shape=jax.ShapeDtypeStruct((BH, S, D), in_dt),
        grid_spec=pltpu.PrefetchScalarGridSpec(
            num_scalar_prefetch=0,
            grid=(NG, n_qt, n_kt),
            in_specs=[q_spec, kv_spec, kv_spec],
            out_specs=o_spec,
            scratch_shapes=[pltpu.VMEM((G, TQ, 1), jnp.float32),
                            pltpu.VMEM((G, TQ, 1), jnp.float32),
                            pltpu.VMEM((G, TQ, D), jnp.float32)],
        ),
        compiler_params=pltpu.CompilerParams(
            dimension_semantics=("parallel", "arbitrary", "arbitrary"),
            vmem_limit_bytes=vmem_limit,
        ),
        cost_estimate=cost,
    )(qf, kf, vf)
    return out.reshape(B, H, S, D)


# --------------------------------------------------------------------------- #
# Reference + self-test
# --------------------------------------------------------------------------- #
def _reference(q, k, v):
    d = q.shape[-1]
    scores = jnp.einsum("bhqd,bhkd->bhqk", q.astype(jnp.float32),
                        k.astype(jnp.float32)) / math.sqrt(d)
    w = jax.nn.softmax(scores, axis=-1)
    out = jnp.einsum("bhqk,bhkd->bhqd", w, v.astype(jnp.float32))
    return out.astype(q.dtype), w.astype(q.dtype)


if __name__ == "__main__":
    keys = jax.random.split(jax.random.PRNGKey(0), 6)

    # Small shape matching the module contract: (batch, n_heads, seq_len, d_head).
    B, H, S, D = 2, 4, 8, 32
    q = jax.random.normal(keys[0], (B, H, S, D), dtype=jnp.float32)
    k = jax.random.normal(keys[1], (B, H, S, D), dtype=jnp.float32)
    v = jax.random.normal(keys[2], (B, H, S, D), dtype=jnp.float32)

    out, attn = scaled_dot_product_attention(q, k, v)
    out, attn = jax.block_until_ready((out, attn))
    ref_out, ref_attn = _reference(q, k, v)
    assert out.shape == (B, H, S, D) and attn.shape == (B, H, S, S)
    assert jnp.allclose(out, ref_out, atol=2e-3, rtol=2e-3), "output mismatch"
    assert jnp.allclose(attn, ref_attn, atol=2e-3, rtol=2e-3), "weights mismatch"

    # Slightly larger shape to exercise query tiling (n_qt=2) and the key-tiled
    # online-softmax fast path (n_kt=2).
    B2, H2, S2, D2 = 2, 2, 256, 64
    q2 = jax.random.normal(keys[3], (B2, H2, S2, D2), dtype=jnp.float32)
    k2 = jax.random.normal(keys[4], (B2, H2, S2, D2), dtype=jnp.float32)
    v2 = jax.random.normal(keys[5], (B2, H2, S2, D2), dtype=jnp.float32)

    out2, attn2 = scaled_dot_product_attention(q2, k2, v2, q_tile=128)
    out2_fast = scaled_dot_product_attention(q2, k2, v2, q_tile=128, k_tile=128,
                                             return_weights=False)
    out2, attn2, out2_fast = jax.block_until_ready((out2, attn2, out2_fast))
    ref_out2, ref_attn2 = _reference(q2, k2, v2)
    assert jnp.allclose(out2, ref_out2, atol=2e-3, rtol=2e-3), "tiled output mismatch"
    assert jnp.allclose(attn2, ref_attn2, atol=2e-3, rtol=2e-3), "tiled weights mismatch"
    assert jnp.allclose(out2_fast, ref_out2, atol=2e-3, rtol=2e-3), "flash output mismatch"

    print("KERNEL_OK")
</pallas_src>

<mosaic_0001>
module attributes {stable_mosaic.version = 11 : i64} {
  func.func @_attn_weights_kernel(%arg0: i32, %arg1: i32, %arg2: memref<4x8x32xf32, #tpu.memory_space<vmem>>, %arg3: memref<4x8x32xf32, #tpu.memory_space<vmem>>, %arg4: memref<4x8x32xf32, #tpu.memory_space<vmem>>, %arg5: memref<4x8x32xf32, #tpu.memory_space<vmem>>, %arg6: memref<4x8x8xf32, #tpu.memory_space<vmem>>) attributes {dimension_semantics = [#tpu.dimension_semantics<parallel>, #tpu.dimension_semantics<arbitrary>], iteration_bounds = array<i64: 2, 1>, scalar_prefetch = 0 : i64, scratch_operands = 0 : i64, tpu.core_type = #tpu.core_type<tc>, window_params = [{transform_indices = @transform_0, window_bounds = array<i64: 4, 8, 32>}, {transform_indices = @transform_1, window_bounds = array<i64: 4, 8, 32>}, {transform_indices = @transform_2, window_bounds = array<i64: 4, 8, 32>}, {transform_indices = @transform_3, window_bounds = array<i64: 4, 8, 32>}, {transform_indices = @transform_4, window_bounds = array<i64: 4, 8, 8>}]} {
    %c0 = arith.constant 0 : index
    %c0_0 = arith.constant 0 : index
    %c0_1 = arith.constant 0 : index
    %0 = vector.load %arg2[%c0, %c0_0, %c0_1] : memref<4x8x32xf32, #tpu.memory_space<vmem>>, vector<4x8x32xf32>
    %cst = arith.constant 0.176776692 : f32
    %1 = vector.broadcast %cst : f32 to vector<4x8x32xf32>
    %2 = arith.mulf %0, %1 : vector<4x8x32xf32>
    %c0_2 = arith.constant 0 : index
    %c0_3 = arith.constant 0 : index
    %c0_4 = arith.constant 0 : index
    %3 = vector.load %arg3[%c0_2, %c0_3, %c0_4] : memref<4x8x32xf32, #tpu.memory_space<vmem>>, vector<4x8x32xf32>
    %c0_5 = arith.constant 0 : index
    %c0_6 = arith.constant 0 : index
    %c0_7 = arith.constant 0 : index
    %4 = vector.load %arg4[%c0_5, %c0_6, %c0_7] : memref<4x8x32xf32, #tpu.memory_space<vmem>>, vector<4x8x32xf32>
    "tpu.trace_start"() <{level = 10 : i32, message = "gqd,gkd->gqk"}> : () -> ()
    %cst_8 = arith.constant dense<0.000000e+00> : vector<4x8x8xf32>
    %5 = tpu.matmul %2, %3, %cst_8 {dimension_numbers = #tpu.dot_dimension_numbers<[2], [2], [1], [1], [0, 0, 0, 1, 1, 1], [0], [0]>} : vector<4x8x32xf32>, vector<4x8x32xf32>, vector<4x8x8xf32> -> vector<4x8x8xf32>
    "tpu.trace_stop"() : () -> ()
    %cst_9 = arith.constant dense<0xFF800000> : vector<4x8xf32>
    %6 = vector.multi_reduction <maximumf>, %5, %cst_9 [2] : vector<4x8x8xf32> to vector<4x8xf32>
    %7 = vector.shape_cast %6 : vector<4x8xf32> to vector<4x8x1xf32>
    %8 = vector.broadcast %7 : vector<4x8x1xf32> to vector<4x8x8xf32>
    %9 = arith.subf %5, %8 : vector<4x8x8xf32>
    %10 = math.exp %9 : vector<4x8x8xf32>
    %cst_10 = arith.constant dense<0.000000e+00> : vector<4x8xf32>
    %11 = vector.multi_reduction <add>, %10, %cst_10 [2] : vector<4x8x8xf32> to vector<4x8xf32>
    %12 = vector.shape_cast %11 : vector<4x8xf32> to vector<4x8x1xf32>
    %13 = vector.broadcast %12 : vector<4x8x1xf32> to vector<4x8x8xf32>
    %14 = arith.divf %10, %13 : vector<4x8x8xf32>
    %c0_11 = arith.constant 0 : index
    %c0_12 = arith.constant 0 : index
    %c0_13 = arith.constant 0 : index
    %15 = vector.load %arg6[%c0_11, %c0_12, %c0_13] : memref<4x8x8xf32, #tpu.memory_space<vmem>>, vector<4x8x8xf32>
    tpu.vector_store %arg6[%c0_11, %c0_12, %c0_13], %14 {strides = array<i32>} : memref<4x8x8xf32, #tpu.memory_space<vmem>>, vector<4x8x8xf32>,
    "tpu.trace_start"() <{level = 10 : i32, message = "gqk,gkd->gqd"}> : () -> ()
    %cst_14 = arith.constant dense<0.000000e+00> : vector<4x8x32xf32>
    %16 = tpu.matmul %14, %4, %cst_14 {dimension_numbers = #tpu.dot_dimension_numbers<[2], [1], [1], [2], [0, 0, 0, 1, 1, 2], [0], [0]>} : vector<4x8x8xf32>, vector<4x8x32xf32>, vector<4x8x32xf32> -> vector<4x8x32xf32>
    "tpu.trace_stop"() : () -> ()
    %c0_15 = arith.constant 0 : index
    %c0_16 = arith.constant 0 : index
    %c0_17 = arith.constant 0 : index
    %17 = vector.load %arg5[%c0_15, %c0_16, %c0_17] : memref<4x8x32xf32, #tpu.memory_space<vmem>>, vector<4x8x32xf32>
    tpu.vector_store %arg5[%c0_15, %c0_16, %c0_17], %16 {strides = array<i32>} : memref<4x8x32xf32, #tpu.memory_space<vmem>>, vector<4x8x32xf32>,
    return
  }
  func.func @transform_0(%arg0: i32, %arg1: i32) -> (i32, i32, i32) {
    %c0_i32 = arith.constant 0 : i32
    %c0_i32_0 = arith.constant 0 : i32
    return %arg0, %arg1, %c0_i32 : i32, i32, i32
  }
  func.func @transform_1(%arg0: i32, %arg1: i32) -> (i32, i32, i32) {
    %c0_i32 = arith.constant 0 : i32
    %c0_i32_0 = arith.constant 0 : i32
    %c0_i32_1 = arith.constant 0 : i32
    return %arg0, %c0_i32, %c0_i32_0 : i32, i32, i32
  }
  func.func @transform_2(%arg0: i32, %arg1: i32) -> (i32, i32, i32) {
    %c0_i32 = arith.constant 0 : i32
    %c0_i32_0 = arith.constant 0 : i32
    %c0_i32_1 = arith.constant 0 : i32
    return %arg0, %c0_i32, %c0_i32_0 : i32, i32, i32
  }
  func.func @transform_3(%arg0: i32, %arg1: i32) -> (i32, i32, i32) {
    %c0_i32 = arith.constant 0 : i32
    %c0_i32_0 = arith.constant 0 : i32
    return %arg0, %arg1, %c0_i32 : i32, i32, i32
  }
  func.func @transform_4(%arg0: i32, %arg1: i32) -> (i32, i32, i32) {
    %c0_i32 = arith.constant 0 : i32
    %c0_i32_0 = arith.constant 0 : i32
    return %arg0, %arg1, %c0_i32 : i32, i32, i32
  }
}

</mosaic_0001>

<llo_original>
// kernel: tpu_custom_call.1
$region0: #{tpu_custom_call.1}
  #allocation0 [shape = 'u32[]', space=smem, size = 0x4, offset = 0x4, fixed_abs, tag = 'smem constant byte address 0x4 - core index']
  #allocation1 [shape = 'u32[72,128]{1,0:T(1,128)}', space=vmem, size = 0x9000, scoped, tag = 'internal scratch']
  %s0 = inlined_call_operand.hbm [shape: f32[8,8,32], index: 0, kind: input, shape index: {}]
  %s1 = inlined_call_operand.hbm [shape: f32[8,8,32], index: 1, kind: input, shape index: {}]
  %s2 = inlined_call_operand.hbm [shape: f32[8,8,32], index: 2, kind: input, shape index: {}]
  %s3 = inlined_call_operand.hbm [shape: f32[8,8,32], index: 3, kind: output, shape index: {0}]
  %s4 = inlined_call_operand.hbm [shape: f32[8,8,8], index: 4, kind: output, shape index: {1}]
  %5 = xla_tuple %s3, %s4
  %s6 = sld [smem:[#allocation0]]
  $region65: #{tpu_custom_call.1} parent=0
    _
  %s8 = ssub.s32 1, %s6
  %s9 = scalar_select 0, %s8, %s6
  $region1: #{tpu_custom_call.1} parent=0
    #allocation2 [shape = 'u8[32768]{0}', space=vmem, size = 0x8000, scoped, tag = 'input window, operand 0']
    #allocation3 [shape = 's32[2]{0}', space=sflag, size = 0x8, scoped, tag = 'scoped memory for tpu_custom_call.1']
    #allocation4 [shape = 's32[2]{0}', space=sflag, size = 0x8, scoped, tag = 'scoped memory for tpu_custom_call.1']
    #allocation5 [shape = 'u8[32768]{0}', space=vmem, size = 0x8000, scoped, tag = 'input window, operand 1']
    #allocation6 [shape = 's32[2]{0}', space=sflag, size = 0x8, scoped, tag = 'scoped memory for tpu_custom_call.1']
    #allocation7 [shape = 'u8[32768]{0}', space=vmem, size = 0x8000, scoped, tag = 'input window, operand 2']
    #allocation8 [shape = 'u8[32768]{0}', space=vmem, size = 0x8000, scoped, tag = 'output window, operand 0']
    #allocation9 [shape = 'u8[32768]{0}', space=vmem, size = 0x8000, scoped, tag = 'output window, operand 1']
    #allocation10 [shape = 's32[2]{0}', space=sflag, size = 0x8, scoped, tag = 'scoped memory for tpu_custom_call.1']
    %10 = vsyncpa [#allocation3], 0
    %s11 = scalar_lea.sflag [#allocation3], 1
    %12 = vsyncpa %s11, 0
    %13 = vsyncpa [#allocation6], 0
    %s14 = scalar_lea.sflag [#allocation6], 1
    %15 = vsyncpa %s14, 0
    %16 = vsyncpa [#allocation4], 0
    %s17 = scalar_lea.sflag [#allocation4], 1
    %18 = vsyncpa %s17, 0
    %19 = vsyncpa [#allocation10], 0
    %s20 = scalar_lea.sflag [#allocation10], 1
    %21 = vsyncpa %s20, 0
    loop: start=0, step=1, limit=4
    $region2: #{tpu_custom_call.1} parent=1 // loop_pre_header
      _
    $region3: #{tpu_custom_call.1} parent=1 // loop_header
      %s23 = sphi 0, %s27
      %p24 = scmp.ge.s32.totalorder %s23, 4
      %s30 = sphi 0, %s42
      %s31 = sphi 0, %s38
      %s32 = sphi 0, %s30
      %s33 = sphi 0, %s31
      %s34 = sphi 0, %s32
      %s35 = sphi 0, %s33
      %s47 = sphi 0, %s49
      %s50 = sphi 0, %s47
      %s51 = sphi 0, %s50
      %s67 = sphi 0, %s51
      %s73 = sphi 0, %s75
      %s76 = sphi 0, %s73
      %s77 = sphi 0, %s76
      %s93 = sphi 0, %s77
      %s99 = sphi 0, %s101
      %s102 = sphi 0, %s99
      %s103 = sphi 0, %s102
      %s119 = sphi 0, %s103
      %s127 = sphi 0, %s129
      %s130 = sphi 0, %s127
      %s131 = sphi 0, %s130
      %s147 = sphi 0, %s131
      %s155 = sphi 0, %s157
      %s158 = sphi 0, %s155
      %s159 = sphi 0, %s158
      %s175 = sphi 0, %s159
    $region4: #{tpu_custom_call.1} parent=1 // loop_header_branch
      %26 = sbr.rel (%p24) target = $region8
    $region5: #{tpu_custom_call.1} parent=1 // loop_body
      %s28 = ssub.s32 %s23, 1
      %s29 = ssub.s32 %s23, 2
      %s36 = sadd.s32 1, %s31
      %p37 = scmp.ge.s32.totalorder %s36, 1
      %s38 = scalar_select %p37, 0, %s36
      %s39 = sadd.s32 1, %s30
      %s40 = scalar_select %p37, %s39, %s30
      %p41 = scmp.ge.s32.totalorder %s40, 2
      %s42 = scalar_select %p41, 0, %s40
      %s43 = ssub.s32 %s30, %s42
      %s44 = ssub.s32 %s31, %s38
      %s45 = sor.u32 %s43, %s44
      %p46 = scmp.eq.s32.totalorder %s45, 0
      %s48 = sadd.s32 %s47, 1
      %s49 = scalar_select %p46, %s47, %s48
      %p52 = pneg %p46
      %p53 = scmp.eq.s32.totalorder %s23, 1
      %p54 = por %p52, %p53
      %p55 = scmp.ne.s32.totalorder %s47, %s50
      %p56 = scmp.eq.s32.totalorder %s23, 0
      %p57 = por %p55, %p56
      %p58 = scmp.ne.s32.totalorder %s47, %s50
      %p59 = scmp.eq.s32.totalorder %s28, 1
      %p60 = por %p58, %p59
      %p61 = scmp.ne.s32.totalorder %s50, %s51
      %p62 = scmp.eq.s32.totalorder %s28, 0
      %p63 = por %p61, %p62
      %p64 = scmp.ne.s32.totalorder %s50, %s51
      %p65 = scmp.eq.s32.totalorder %s29, 1
      %p66 = por %p64, %p65
      %p68 = scmp.ne.s32.totalorder %s51, %s67
      %p69 = scmp.eq.s32.totalorder %s29, 0
      %p70 = por %p68, %p69
      %s71 = ssub.s32 %s30, %s42
      %p72 = scmp.eq.s32.totalorder %s71, 0
      %s74 = sadd.s32 %s73, 1
      %s75 = scalar_select %p72, %s73, %s74
      %p78 = pneg %p72
      %p79 = scmp.eq.s32.totalorder %s23, 1
      %p80 = por %p78, %p79
      %p81 = scmp.ne.s32.totalorder %s73, %s76
      %p82 = scmp.eq.s32.totalorder %s23, 0
      %p83 = por %p81, %p82
      %p84 = scmp.ne.s32.totalorder %s73, %s76
      %p85 = scmp.eq.s32.totalorder %s28, 1
      %p86 = por %p84, %p85
      %p87 = scmp.ne.s32.totalorder %s76, %s77
      %p88 = scmp.eq.s32.totalorder %s28, 0
      %p89 = por %p87, %p88
      %p90 = scmp.ne.s32.totalorder %s76, %s77
      %p91 = scmp.eq.s32.totalorder %s29, 1
      %p92 = por %p90, %p91
      %p94 = scmp.ne.s32.totalorder %s77, %s93
      %p95 = scmp.eq.s32.totalorder %s29, 0
      %p96 = por %p94, %p95
      %s97 = ssub.s32 %s30, %s42
      %p98 = scmp.eq.s32.totalorder %s97, 0
      %s100 = sadd.s32 %s99, 1
      %s101 = scalar_select %p98, %s99, %s100
      %p104 = pneg %p98
      %p105 = scmp.eq.s32.totalorder %s23, 1
      %p106 = por %p104, %p105
      %p107 = scmp.ne.s32.totalorder %s99, %s102
      %p108 = scmp.eq.s32.totalorder %s23, 0
      %p109 = por %p107, %p108
      %p110 = scmp.ne.s32.totalorder %s99, %s102
      %p111 = scmp.eq.s32.totalorder %s28, 1
      %p112 = por %p110, %p111
      %p113 = scmp.ne.s32.totalorder %s102, %s103
      %p114 = scmp.eq.s32.totalorder %s28, 0
      %p115 = por %p113, %p114
      %p116 = scmp.ne.s32.totalorder %s102, %s103
      %p117 = scmp.eq.s32.totalorder %s29, 1
      %p118 = por %p116, %p117
      %p120 = scmp.ne.s32.totalorder %s103, %s119
      %p121 = scmp.eq.s32.totalorder %s29, 0
      %p122 = por %p120, %p121
      %s123 = ssub.s32 %s30, %s42
      %s124 = ssub.s32 %s31, %s38
      %s125 = sor.u32 %s123, %s124
      %p126 = scmp.eq.s32.totalorder %s125, 0
      %s128 = sadd.s32 %s127, 1
      %s129 = scalar_select %p126, %s127, %s128
      %p132 = pneg %p126
      %p133 = scmp.eq.s32.totalorder %s23, 1
      %p134 = por %p132, %p133
      %p135 = scmp.ne.s32.totalorder %s127, %s130
      %p136 = scmp.eq.s32.totalorder %s23, 0
      %p137 = por %p135, %p136
      %p138 = scmp.ne.s32.totalorder %s127, %s130
      %p139 = scmp.eq.s32.totalorder %s28, 1
      %p140 = por %p138, %p139
      %p141 = scmp.ne.s32.totalorder %s130, %s131
      %p142 = scmp.eq.s32.totalorder %s28, 0
      %p143 = por %p141, %p142
      %p144 = scmp.ne.s32.totalorder %s130, %s131
      %p145 = scmp.eq.s32.totalorder %s29, 1
      %p146 = por %p144, %p145
      %p148 = scmp.ne.s32.totalorder %s131, %s147
      %p149 = scmp.eq.s32.totalorder %s29, 0
      %p150 = por %p148, %p149
      %s151 = ssub.s32 %s30, %s42
      %s152 = ssub.s32 %s31, %s38
      %s153 = sor.u32 %s151, %s152
      %p154 = scmp.eq.s32.totalorder %s153, 0
      %s156 = sadd.s32 %s155, 1
      %s157 = scalar_select %p154, %s155, %s156
      %p160 = pneg %p154
      %p161 = scmp.eq.s32.totalorder %s23, 1
      %p162 = por %p160, %p161
      %p163 = scmp.ne.s32.totalorder %s155, %s158
      %p164 = scmp.eq.s32.totalorder %s23, 0
      %p165 = por %p163, %p164
      %p166 = scmp.ne.s32.totalorder %s155, %s158
      %p167 = scmp.eq.s32.totalorder %s28, 1
      %p168 = por %p166, %p167
      %p169 = scmp.ne.s32.totalorder %s158, %s159
      %p170 = scmp.eq.s32.totalorder %s28, 0
      %p171 = por %p169, %p170
      %p172 = scmp.ne.s32.totalorder %s158, %s159
      %p173 = scmp.eq.s32.totalorder %s29, 1
      %p174 = por %p172, %p173
      %p176 = scmp.ne.s32.totalorder %s159, %s175
      %p177 = scmp.eq.s32.totalorder %s29, 0
      %p178 = por %p176, %p177
      %p179 = scmp.le.s32.totalorder 1, %s23
      %p180 = scmp.lt.s32.totalorder %s23, 3
      %p181 = pnand %p179, %p180
      %p182 = pneg %p181
      // Predicated region
      $region9: #{tpu_custom_call.1} parent=5 // pred_check
        _
      $region10: #{tpu_custom_call.1} parent=5 // pred_check_branch
        %184 = sbr.rel (%p181) target = $region12
      $region11: #{tpu_custom_call.1} parent=5 // pred_region
        %s185 = ssub.s32 %s23, 1
      $region12: #{tpu_custom_call.1} parent=5 // pred_fallthru
        _
      %p186 = scmp.lt.s32.totalorder %s23, 2
      // Predicated region
      $region13: #{tpu_custom_call.1} parent=5 // pred_check
        %p187 = pneg %p186
      $region14: #{tpu_custom_call.1} parent=5 // pred_check_branch
        %189 = sbr.rel (%p187) target = $region16
      $region15: #{tpu_custom_call.1} parent=5 // pred_region
        // Predicated region
        $region17: #{tpu_custom_call.1} parent=15 // pred_check
          %p190 = pneg %p57
        $region18: #{tpu_custom_call.1} parent=15 // pred_check_branch
          %192 = sbr.rel (%p190) target = $region20
        $region19: #{tpu_custom_call.1} parent=15 // pred_region
          %s193 = sand.u32 %s47, 1
          %s194 = scalar_lea.sflag [#allocation3], %s193
          %s195 = sand.u32 %s47, 1
          %s196 = smul.addr %s195, 32
          %s197 = scalar_lea.vmem [#allocation2], %s196
          %s198 = smul.u32 4, %s30
          %200 = vsyncadd %s194, 0
          %s201 = sadd.s32 %s31, %s198
          %s202 = smul.addr %s201, 8
          %s203 = scalar_lea.hbm %s0, %s202
          %s204 = sshll.u32 %s203, 4
          %s205 = int_to_ptr.hbm [resolvable:$true] %s204
          %s206 = sshll.u32 %s197, 4
          %s207 = int_to_ptr.vmem [resolvable:$true] %s206
          %212 = dma.hbm_to_vmem [thread:$0]  %s205, 512, %s207, %s194, 128, 128, 8
        $region20: #{tpu_custom_call.1} parent=15 // pred_fallthru
          _
        // Predicated region
        $region21: #{tpu_custom_call.1} parent=15 // pred_check
          %p213 = pneg %p83
        $region22: #{tpu_custom_call.1} parent=15 // pred_check_branch
          %215 = sbr.rel (%p213) target = $region24
        $region23: #{tpu_custom_call.1} parent=15 // pred_region
          %s216 = sand.u32 %s23, 1
          %s217 = scalar_lea.sflag [#allocation6], %s216
          %s218 = sand.u32 %s73, 1
          %s219 = smul.addr %s218, 32
          %s220 = scalar_lea.vmem [#allocation5], %s219
          %s221 = smul.u32 4, %s30
          %223 = vsyncadd %s217, 0
          %s224 = smul.addr %s221, 8
          %s225 = scalar_lea.hbm %s1, %s224
          %s226 = sshll.u32 %s225, 4
          %s227 = int_to_ptr.hbm [resolvable:$true] %s226
          %s228 = sshll.u32 %s220, 4
          %s229 = int_to_ptr.vmem [resolvable:$true] %s228
          %234 = dma.hbm_to_vmem [thread:$0]  %s227, 512, %s229, %s217, 128, 128, 8
        $region24: #{tpu_custom_call.1} parent=15 // pred_fallthru
          _
        // Predicated region
        $region25: #{tpu_custom_call.1} parent=15 // pred_check
          %p235 = pneg %p109
        $region26: #{tpu_custom_call.1} parent=15 // pred_check_branch
          %237 = sbr.rel (%p235) target = $region28
        $region27: #{tpu_custom_call.1} parent=15 // pred_region
          %s238 = sand.u32 %s23, 1
          %s239 = scalar_lea.sflag [#allocation6], %s238
          %s240 = sand.u32 %s99, 1
          %s241 = smul.addr %s240, 32
          %s242 = scalar_lea.vmem [#allocation7], %s241
          %s243 = smul.u32 4, %s30
          %245 = vsyncadd %s239, 0
          %s246 = smul.addr %s243, 8
          %s247 = scalar_lea.hbm %s2, %s246
          %s248 = sshll.u32 %s247, 4
          %s249 = int_to_ptr.hbm [resolvable:$true] %s248
          %s250 = sshll.u32 %s242, 4
          %s251 = int_to_ptr.vmem [resolvable:$true] %s250
          %256 = dma.hbm_to_vmem [thread:$0]  %s249, 512, %s251, %s239, 128, 128, 8
        $region28: #{tpu_custom_call.1} parent=15 // pred_fallthru
          _
      $region16: #{tpu_custom_call.1} parent=5 // pred_fallthru
        _
      %p257 = scmp.le.s32.totalorder 1, %s23
      %p258 = scmp.lt.s32.totalorder %s23, 3
      %p259 = pnand %p257, %p258
      %p260 = pneg %p259
      // Predicated region
      $region29: #{tpu_custom_call.1} parent=5 // pred_check
        _
      $region30: #{tpu_custom_call.1} parent=5 // pred_check_branch
        %262 = sbr.rel (%p259) target = $region32
      $region31: #{tpu_custom_call.1} parent=5 // pred_region
        %s263 = ssub.s32 %s23, 1
        %s264 = sand.u32 %s50, 1
        %s265 = scalar_lea.sflag [#allocation3], %s264
        %s266 = sand.u32 %s50, 1
        %s267 = smul.addr %s266, 32
        %s268 = scalar_lea.vmem [#allocation2], %s267
        // Predicated region
        $region33: #{tpu_custom_call.1} parent=31 // pred_check
          %p269 = pneg %p63
        $region34: #{tpu_custom_call.1} parent=31 // pred_check_branch
          %271 = sbr.rel (%p269) target = $region36
        $region35: #{tpu_custom_call.1} parent=31 // pred_region
          %273 = dma.done %s265, 512
        $region36: #{tpu_custom_call.1} parent=31 // pred_fallthru
          _
        %s274 = sand.u32 %s28, 1
        %s275 = scalar_lea.sflag [#allocation6], %s274
        %s276 = sand.u32 %s76, 1
        %s277 = smul.addr %s276, 32
        %s278 = scalar_lea.vmem [#allocation5], %s277
        // Predicated region
        $region37: #{tpu_custom_call.1} parent=31 // pred_check
          %p279 = pneg %p89
        $region38: #{tpu_custom_call.1} parent=31 // pred_check_branch
          %281 = sbr.rel (%p279) target = $region40
        $region39: #{tpu_custom_call.1} parent=31 // pred_region
          %283 = dma.done %s275, 512
        $region40: #{tpu_custom_call.1} parent=31 // pred_fallthru
          _
        %s284 = sand.u32 %s28, 1
        %s285 = scalar_lea.sflag [#allocation6], %s284
        %s286 = sand.u32 %s102, 1
        %s287 = smul.addr %s286, 32
        %s288 = scalar_lea.vmem [#allocation7], %s287
        // Predicated region
        $region41: #{tpu_custom_call.1} parent=31 // pred_check
          %p289 = pneg %p115
        $region42: #{tpu_custom_call.1} parent=31 // pred_check_branch
          %291 = sbr.rel (%p289) target = $region44
        $region43: #{tpu_custom_call.1} parent=31 // pred_region
          %293 = dma.done %s285, 512
        $region44: #{tpu_custom_call.1} parent=31 // pred_fallthru
          _
        %s294 = sand.u32 %s50, 1
        %s295 = scalar_lea.sflag [#allocation3], %s294
        %s296 = sand.u32 %s50, 1
        %s297 = smul.addr %s296, 32
        %s298 = scalar_lea.vmem [#allocation2], %s297
        %p299 = pneg %p63
        %p300 = pneg %p60
        %s301 = sand.u32 %s28, 1
        %s302 = scalar_lea.sflag [#allocation6], %s301
        %s303 = sand.u32 %s76, 1
        %s304 = smul.addr %s303, 32
        %s305 = scalar_lea.vmem [#allocation5], %s304
        %p306 = pneg %p89
        %p307 = pneg %p86
        %s308 = sand.u32 %s28, 1
        %s309 = scalar_lea.sflag [#allocation6], %s308
        %s310 = sand.u32 %s102, 1
        %s311 = smul.addr %s310, 32
        %s312 = scalar_lea.vmem [#allocation7], %s311
        %p313 = pneg %p115
        %p314 = pneg %p112
        %p315 = pneg %p143
        %p316 = pneg %p140
        %s317 = sand.u32 %s130, 1
        %s318 = scalar_lea.sflag [#allocation4], %s317
        %s319 = sand.u32 %s130, 1
        %s320 = smul.addr %s319, 32
        %s321 = scalar_lea.vmem [#allocation8], %s320
        %p322 = pneg %p171
        %p323 = pneg %p168
        %s324 = sand.u32 %s158, 1
        %s325 = scalar_lea.sflag [#allocation10], %s324
        %s326 = sand.u32 %s158, 1
        %s327 = smul.addr %s326, 32
        %s328 = scalar_lea.vmem [#allocation9], %s327
        %s329 = smul.u32 4, %s32
        %s330 = smul.u32 4, %s32
        %s331 = smul.u32 4, %s32
        %s332 = smul.u32 4, %s32
        %s333 = smul.u32 4, %s32
        %v334 = vld [vmem:[%s268] sm:$0xff]
        %v335 = vld [vmem:[%s268 + $0x8] sm:$0xff]
        %v336 = vld [vmem:[%s268 + $0x10] sm:$0xff]
        %v337 = vld [vmem:[%s268 + $0x18] sm:$0xff]
        %v338 = vmul.f32 %v334, 0.17677669
        %v339 = vmul.f32 %v335, 0.17677669
        %v340 = vmul.f32 %v336, 0.17677669
        %v341 = vmul.f32 %v337, 0.17677669
        %v342 = vld [vmem:[%s278] sm:$0xff]
        %v343 = vld [vmem:[%s278 + $0x8] sm:$0xff]
        %v344 = vld [vmem:[%s278 + $0x10] sm:$0xff]
        %v345 = vld [vmem:[%s278 + $0x18] sm:$0xff]
        %v346 = vld [vmem:[%s288] sm:$0xff]
        %v347 = vld [vmem:[%s288 + $0x8] sm:$0xff]
        %v348 = vld [vmem:[%s288 + $0x10] sm:$0xff]
        %v349 = vld [vmem:[%s288 + $0x18] sm:$0xff]
        %vm350 = vcmask 261120
        %v352 = vsel %vm350, %v338, 0
        %v355 = vsel %vm350, %v342, 0
        %357 = vmatpush.xpose.msra.mxu0 0.0
        %358 = vmatpush.xpose.msra.mxu0 0.0
        %359 = vmatpush.xpose.msra.mxu0 0.0
        %360 = vmatpush.xpose.msra.mxu0 0.0
        %361 = vmatpush.xpose.msra.mxu0 0.0
        %362 = vmatpush.xpose.msra.mxu0 0.0
        %363 = vmatpush.xpose.msra.mxu0 0.0
        %364 = vmatpush.xpose.msra.mxu0 0.0
        %365 = vmatpush.xpose.msra.mxu0 0.0
        %366 = vmatpush.xpose.msra.mxu0 0.0
        %367 = vmatpush.xpose.msra.mxu0 0.0
        %368 = vmatpush.xpose.msra.mxu0 0.0
        %369 = vmatpush.xpose.msra.mxu0 0.0
        %370 = vmatpush.xpose.msra.mxu0 0.0
        %371 = vmatpush.xpose.msra.mxu0 0.0
        %372 = vmatpush.xpose.msra.mxu0 %v355
        %373 = vmatmul.f32.gmra.mxu0 %v352
        %v374 = vpop.f32.mrf.mxu0
        %v375 = vadd.f32 0.0, %v374
        %376 = vdwg.mxu0
        %v378 = vsel %vm350, %v339, 0
        %v381 = vsel %vm350, %v343, 0
        %383 = vmatpush.xpose.msra.mxu0 0.0
        %384 = vmatpush.xpose.msra.mxu0 0.0
        %385 = vmatpush.xpose.msra.mxu0 0.0
        %386 = vmatpush.xpose.msra.mxu0 0.0
        %387 = vmatpush.xpose.msra.mxu0 0.0
        %388 = vmatpush.xpose.msra.mxu0 0.0
        %389 = vmatpush.xpose.msra.mxu0 0.0
        %390 = vmatpush.xpose.msra.mxu0 0.0
        %391 = vmatpush.xpose.msra.mxu0 0.0
        %392 = vmatpush.xpose.msra.mxu0 0.0
        %393 = vmatpush.xpose.msra.mxu0 0.0
        %394 = vmatpush.xpose.msra.mxu0 0.0
        %395 = vmatpush.xpose.msra.mxu0 0.0
        %396 = vmatpush.xpose.msra.mxu0 0.0
        %397 = vmatpush.xpose.msra.mxu0 0.0
        %398 = vmatpush.xpose.msra.mxu0 %v381
        %399 = vmatmul.f32.gmra.mxu0 %v378
        %v400 = vpop.f32.mrf.mxu0
        %v401 = vadd.f32 0.0, %v400
        %402 = vdwg.mxu0
        %v404 = vsel %vm350, %v340, 0
        %v407 = vsel %vm350, %v344, 0
        %409 = vmatpush.xpose.msra.mxu0 0.0
        %410 = vmatpush.xpose.msra.mxu0 0.0
        %411 = vmatpush.xpose.msra.mxu0 0.0
        %412 = vmatpush.xpose.msra.mxu0 0.0
        %413 = vmatpush.xpose.msra.mxu0 0.0
        %414 = vmatpush.xpose.msra.mxu0 0.0
        %415 = vmatpush.xpose.msra.mxu0 0.0
        %416 = vmatpush.xpose.msra.mxu0 0.0
        %417 = vmatpush.xpose.msra.mxu0 0.0
        %418 = vmatpush.xpose.msra.mxu0 0.0
        %419 = vmatpush.xpose.msra.mxu0 0.0
        %420 = vmatpush.xpose.msra.mxu0 0.0
        %421 = vmatpush.xpose.msra.mxu0 0.0
        %422 = vmatpush.xpose.msra.mxu0 0.0
        %423 = vmatpush.xpose.msra.mxu0 0.0
        %424 = vmatpush.xpose.msra.mxu0 %v407
        %425 = vmatmul.f32.gmra.mxu0 %v404
        %v426 = vpop.f32.mrf.mxu0
        %v427 = vadd.f32 0.0, %v426
        %428 = vdwg.mxu0
        %v430 = vsel %vm350, %v341, 0
        %v433 = vsel %vm350, %v345, 0
        %435 = vmatpush.xpose.msra.mxu0 0.0
        %436 = vmatpush.xpose.msra.mxu0 0.0
        %437 = vmatpush.xpose.msra.mxu0 0.0
        %438 = vmatpush.xpose.msra.mxu0 0.0
        %439 = vmatpush.xpose.msra.mxu0 0.0
        %440 = vmatpush.xpose.msra.mxu0 0.0
        %441 = vmatpush.xpose.msra.mxu0 0.0
        %442 = vmatpush.xpose.msra.mxu0 0.0
        %443 = vmatpush.xpose.msra.mxu0 0.0
        %444 = vmatpush.xpose.msra.mxu0 0.0
        %445 = vmatpush.xpose.msra.mxu0 0.0
        %446 = vmatpush.xpose.msra.mxu0 0.0
        %447 = vmatpush.xpose.msra.mxu0 0.0
        %448 = vmatpush.xpose.msra.mxu0 0.0
        %449 = vmatpush.xpose.msra.mxu0 0.0
        %450 = vmatpush.xpose.msra.mxu0 %v433
        %451 = vmatmul.f32.gmra.mxu0 %v430
        %v452 = vpop.f32.mrf.mxu0
        %v453 = vadd.f32 0.0, %v452
        %454 = vdwg.mxu0
        %vm455 = vcmask 64512
        %v456 = vsel %vm455, %v375, -inf
        %457 = vmax.xlane.f32.xlu0 %v456
        %v458 = vpop.xlane.xlu0 %457
        %v459 = vsel %vm455, %v401, -inf
        %460 = vmax.xlane.f32.xlu0 %v459
        %v461 = vpop.xlane.xlu0 %460
        %v462 = vsel %vm455, %v427, -inf
        %463 = vmax.xlane.f32.xlu0 %v462
        %v464 = vpop.xlane.xlu0 %463
        %v465 = vsel %vm455, %v453, -inf
        %466 = vmax.xlane.f32.xlu0 %v465
        %v467 = vpop.xlane.xlu0 %466
        %v468 = vsub.f32 %v375, %v458
        %v469 = vsub.f32 %v401, %v461
        %v470 = vsub.f32 %v427, %v464
        %v471 = vsub.f32 %v453, %v467
        %v472 = vmul.f32 %v468, 1.442695
        %v473 = vpow.pop %v472
        %v474 = vmul.f32 %v469, 1.442695
        %v475 = vpow.pop %v474
        %v476 = vmul.f32 %v470, 1.442695
        %v477 = vpow.pop %v476
        %v478 = vmul.f32 %v471, 1.442695
        %v479 = vpow.pop %v478
        %v480 = vsel %vm455, %v473, 0.0
        %481 = vadd.xlane.f32.xlu0 %v480
        %v482 = vpop.xlane.xlu0 %481
        %v483 = vsel %vm455, %v475, 0.0
        %484 = vadd.xlane.f32.xlu0 %v483
        %v485 = vpop.xlane.xlu0 %484
        %v486 = vsel %vm455, %v477, 0.0
        %487 = vadd.xlane.f32.xlu0 %v486
        %v488 = vpop.xlane.xlu0 %487
        %v489 = vsel %vm455, %v479, 0.0
        %490 = vadd.xlane.f32.xlu0 %v489
        %v491 = vpop.xlane.xlu0 %490
        %v492 = vrcp.pop %v482
        %v493 = vmul.f32 %v482, %v492
        %v494 = vsub.f32 1.0, %v493
        %v495 = vmul.f32 %v492, %v494
        %v496 = vadd.f32 %v492, %v495
        %vm497 = vweird.f32 %v482
        %vm498 = vweird.f32 %v492
        %vm499 = vmor %vm497, %vm498
        %v500 = vsel %vm499, %v492, %v496
        %v501 = vand.u32 2147483647, %v482
        %vm502 = vcmp.eq.f32.partialorder %v501, 8.507059e+37
        %v503 = vand.u32 %v482, 2147483648
        %v504 = vor.u32 1.1754944e-38, %v503
        %v505 = vsel %vm502, %v504, %v500
        %v506 = vmul.f32 %v473, %v505
        %v507 = vrcp.pop %v485
        %v508 = vmul.f32 %v485, %v507
        %v509 = vsub.f32 1.0, %v508
        %v510 = vmul.f32 %v507, %v509
        %v511 = vadd.f32 %v507, %v510
        %vm512 = vweird.f32 %v485
        %vm513 = vweird.f32 %v507
        %vm514 = vmor %vm512, %vm513
        %v515 = vsel %vm514, %v507, %v511
        %v516 = vand.u32 2147483647, %v485
        %vm517 = vcmp.eq.f32.partialorder %v516, 8.507059e+37
        %v518 = vand.u32 %v485, 2147483648
        %v519 = vor.u32 1.1754944e-38, %v518
        %v520 = vsel %vm517, %v519, %v515
        %v521 = vmul.f32 %v475, %v520
        %v522 = vrcp.pop %v488
        %v523 = vmul.f32 %v488, %v522
        %v524 = vsub.f32 1.0, %v523
        %v525 = vmul.f32 %v522, %v524
        %v526 = vadd.f32 %v522, %v525
        %vm527 = vweird.f32 %v488
        %vm528 = vweird.f32 %v522
        %vm529 = vmor %vm527, %vm528
        %v530 = vsel %vm529, %v522, %v526
        %v531 = vand.u32 2147483647, %v488
        %vm532 = vcmp.eq.f32.partialorder %v531, 8.507059e+37
        %v533 = vand.u32 %v488, 2147483648
        %v534 = vor.u32 1.1754944e-38, %v533
        %v535 = vsel %vm532, %v534, %v530
        %v536 = vmul.f32 %v477, %v535
        %v537 = vrcp.pop %v491
        %v538 = vmul.f32 %v491, %v537
        %v539 = vsub.f32 1.0, %v538
        %v540 = vmul.f32 %v537, %v539
        %v541 = vadd.f32 %v537, %v540
        %vm542 = vweird.f32 %v491
        %vm543 = vweird.f32 %v537
        %vm544 = vmor %vm542, %vm543
        %v545 = vsel %vm544, %v537, %v541
        %v546 = vand.u32 2147483647, %v491
        %vm547 = vcmp.eq.f32.partialorder %v546, 8.507059e+37
        %v548 = vand.u32 %v491, 2147483648
        %v549 = vor.u32 1.1754944e-38, %v548
        %v550 = vsel %vm547, %v549, %v545
        %v551 = vmul.f32 %v479, %v550
        %552 = vst.msk [vmem:[%s328] sm:$0xff] %vm455, %v506
        %553 = vst.msk [vmem:[%s328 + $0x8] sm:$0xff] %vm455, %v521
        %554 = vst.msk [vmem:[%s328 + $0x10] sm:$0xff] %vm455, %v536
        %555 = vst.msk [vmem:[%s328 + $0x18] sm:$0xff] %vm455, %v551
        %v557 = vsel %vm455, %v506, 0
        %559 = vmatpush.msra.mxu0 0.0
        %560 = vmatpush.msra.mxu0 0.0
        %561 = vmatpush.msra.mxu0 0.0
        %562 = vmatpush.msra.mxu0 0.0
        %563 = vmatpush.msra.mxu0 0.0
        %564 = vmatpush.msra.mxu0 0.0
        %565 = vmatpush.msra.mxu0 0.0
        %566 = vmatpush.msra.mxu0 0.0
        %567 = vmatpush.msra.mxu0 0.0
        %568 = vmatpush.msra.mxu0 0.0
        %569 = vmatpush.msra.mxu0 0.0
        %570 = vmatpush.msra.mxu0 0.0
        %571 = vmatpush.msra.mxu0 0.0
        %572 = vmatpush.msra.mxu0 0.0
        %573 = vmatpush.msra.mxu0 0.0
        %574 = vmatpush.msra.mxu0 %v346
        %575 = vmatmul.f32.gmra.mxu0 %v557
        %v576 = vpop.f32.mrf.mxu0
        %v577 = vadd.f32 0.0, %v576
        %578 = vdwg.mxu0
        %v580 = vsel %vm455, %v521, 0
        %582 = vmatpush.msra.mxu0 0.0
        %583 = vmatpush.msra.mxu0 0.0
        %584 = vmatpush.msra.mxu0 0.0
        %585 = vmatpush.msra.mxu0 0.0
        %586 = vmatpush.msra.mxu0 0.0
        %587 = vmatpush.msra.mxu0 0.0
        %588 = vmatpush.msra.mxu0 0.0
        %589 = vmatpush.msra.mxu0 0.0
        %590 = vmatpush.msra.mxu0 0.0
        %591 = vmatpush.msra.mxu0 0.0
        %592 = vmatpush.msra.mxu0 0.0
        %593 = vmatpush.msra.mxu0 0.0
        %594 = vmatpush.msra.mxu0 0.0
        %595 = vmatpush.msra.mxu0 0.0
        %596 = vmatpush.msra.mxu0 0.0
        %597 = vmatpush.msra.mxu0 %v347
        %598 = vmatmul.f32.gmra.mxu0 %v580
        %v599 = vpop.f32.mrf.mxu0
        %v600 = vadd.f32 0.0, %v599
        %601 = vdwg.mxu0
        %v603 = vsel %vm455, %v536, 0
        %605 = vmatpush.msra.mxu0 0.0
        %606 = vmatpush.msra.mxu0 0.0
        %607 = vmatpush.msra.mxu0 0.0
        %608 = vmatpush.msra.mxu0 0.0
        %609 = vmatpush.msra.mxu0 0.0
        %610 = vmatpush.msra.mxu0 0.0
        %611 = vmatpush.msra.mxu0 0.0
        %612 = vmatpush.msra.mxu0 0.0
        %613 = vmatpush.msra.mxu0 0.0
        %614 = vmatpush.msra.mxu0 0.0
        %615 = vmatpush.msra.mxu0 0.0
        %616 = vmatpush.msra.mxu0 0.0
        %617 = vmatpush.msra.mxu0 0.0
        %618 = vmatpush.msra.mxu0 0.0
        %619 = vmatpush.msra.mxu0 0.0
        %620 = vmatpush.msra.mxu0 %v348
        %621 = vmatmul.f32.gmra.mxu0 %v603
        %v622 = vpop.f32.mrf.mxu0
        %v623 = vadd.f32 0.0, %v622
        %624 = vdwg.mxu0
        %v626 = vsel %vm455, %v551, 0
        %628 = vmatpush.msra.mxu0 0.0
        %629 = vmatpush.msra.mxu0 0.0
        %630 = vmatpush.msra.mxu0 0.0
        %631 = vmatpush.msra.mxu0 0.0
        %632 = vmatpush.msra.mxu0 0.0
        %633 = vmatpush.msra.mxu0 0.0
        %634 = vmatpush.msra.mxu0 0.0
        %635 = vmatpush.msra.mxu0 0.0
        %636 = vmatpush.msra.mxu0 0.0
        %637 = vmatpush.msra.mxu0 0.0
        %638 = vmatpush.msra.mxu0 0.0
        %639 = vmatpush.msra.mxu0 0.0
        %640 = vmatpush.msra.mxu0 0.0
        %641 = vmatpush.msra.mxu0 0.0
        %642 = vmatpush.msra.mxu0 0.0
        %643 = vmatpush.msra.mxu0 %v349
        %644 = vmatmul.f32.gmra.mxu0 %v626
        %v645 = vpop.f32.mrf.mxu0
        %v646 = vadd.f32 0.0, %v645
        %647 = vdwg.mxu0
        %648 = vst.msk [vmem:[%s321] sm:$0xff] %vm350, %v577
        %649 = vst.msk [vmem:[%s321 + $0x8] sm:$0xff] %vm350, %v600
        %650 = vst.msk [vmem:[%s321 + $0x10] sm:$0xff] %vm350, %v623
        %651 = vst.msk [vmem:[%s321 + $0x18] sm:$0xff] %vm350, %v646
        %s652 = sand.u32 %s130, 1
        %s653 = scalar_lea.sflag [#allocation4], %s652
        %s654 = sand.u32 %s130, 1
        %s655 = smul.addr %s654, 32
        %s656 = scalar_lea.vmem [#allocation8], %s655
        %s657 = sand.u32 %s158, 1
        %s658 = scalar_lea.sflag [#allocation10], %s657
        %s659 = sand.u32 %s158, 1
        %s660 = smul.addr %s659, 32
        %s661 = scalar_lea.vmem [#allocation9], %s660
        // Predicated region
        $region45: #{tpu_custom_call.1} parent=31 // pred_check
          %p662 = pneg %p140
        $region46: #{tpu_custom_call.1} parent=31 // pred_check_branch
          %664 = sbr.rel (%p662) target = $region48
        $region47: #{tpu_custom_call.1} parent=31 // pred_region
          %s665 = smul.u32 4, %s32
          %667 = vsyncadd %s653, 0
          %s668 = sadd.s32 %s33, %s665
          %s669 = smul.addr %s668, 8
          %s670 = scalar_lea.hbm %s3, %s669
          %s671 = sshll.u32 %s656, 4
          %s672 = int_to_ptr.vmem [resolvable:$true] %s671
          %s673 = sshll.u32 %s670, 4
          %s674 = int_to_ptr.hbm [resolvable:$true] %s673
          %679 = dma.vmem_to_hbm [thread:$0]  %s672, 512, %s674, %s653, 128, 128, 8
        $region48: #{tpu_custom_call.1} parent=31 // pred_fallthru
          _
        // Predicated region
        $region49: #{tpu_custom_call.1} parent=31 // pred_check
          %p680 = pneg %p168
        $region50: #{tpu_custom_call.1} parent=31 // pred_check_branch
          %682 = sbr.rel (%p680) target = $region52
        $region51: #{tpu_custom_call.1} parent=31 // pred_region
          %s683 = smul.u32 4, %s32
          %685 = vsyncadd %s658, 0
          %s686 = sadd.s32 %s33, %s683
          %s687 = smul.addr %s686, 8
          %s688 = scalar_lea.hbm %s4, %s687
          %s689 = sshll.u32 %s661, 4
          %s690 = int_to_ptr.vmem [resolvable:$true] %s689
          %s691 = sshll.u32 %s688, 4
          %s692 = int_to_ptr.hbm [resolvable:$true] %s691
          %697 = dma.vmem_to_hbm [thread:$0]  %s690, 512, %s692, %s658, 128, 128, 8
        $region52: #{tpu_custom_call.1} parent=31 // pred_fallthru
          _
      $region32: #{tpu_custom_call.1} parent=5 // pred_fallthru
        _
      %p698 = scmp.le.s32.totalorder 2, %s23
      // Predicated region
      $region53: #{tpu_custom_call.1} parent=5 // pred_check
        %p699 = pneg %p698
      $region54: #{tpu_custom_call.1} parent=5 // pred_check_branch
        %701 = sbr.rel (%p699) target = $region56
      $region55: #{tpu_custom_call.1} parent=5 // pred_region
        %s702 = ssub.s32 %s23, 2
        // Predicated region
        $region57: #{tpu_custom_call.1} parent=55 // pred_check
          %p703 = pneg %p146
        $region58: #{tpu_custom_call.1} parent=55 // pred_check_branch
          %705 = sbr.rel (%p703) target = $region60
        $region59: #{tpu_custom_call.1} parent=55 // pred_region
          %s706 = sand.u32 %s131, 1
          %s707 = scalar_lea.sflag [#allocation4], %s706
          %s708 = sand.u32 %s131, 1
          %s709 = smul.addr %s708, 32
          %s710 = scalar_lea.vmem [#allocation8], %s709
          %712 = dma.done %s707, 512
        $region60: #{tpu_custom_call.1} parent=55 // pred_fallthru
          _
        // Predicated region
        $region61: #{tpu_custom_call.1} parent=55 // pred_check
          %p713 = pneg %p174
        $region62: #{tpu_custom_call.1} parent=55 // pred_check_branch
          %715 = sbr.rel (%p713) target = $region64
        $region63: #{tpu_custom_call.1} parent=55 // pred_region
          %s716 = sand.u32 %s159, 1
          %s717 = scalar_lea.sflag [#allocation10], %s716
          %s718 = sand.u32 %s159, 1
          %s719 = smul.addr %s718, 32
          %s720 = scalar_lea.vmem [#allocation9], %s719
          %722 = dma.done %s717, 512
        $region64: #{tpu_custom_call.1} parent=55 // pred_fallthru
          _
      $region56: #{tpu_custom_call.1} parent=5 // pred_fallthru
        _
    $region6: #{tpu_custom_call.1} parent=1 // loop_footer
      %s27 = sadd.s32 1, %s23
    $region7: #{tpu_custom_call.1} parent=1 // loop_footer_branch
      %22 = sbr.rel target = $region3
    $region8: #{tpu_custom_call.1} parent=1 // loop_exit
      _
    %723 = vsyncpa [#allocation3], 1
    %s724 = scalar_lea.sflag [#allocation3], 1
    %725 = vsyncpa %s724, 1
    %726 = vsyncpa [#allocation6], 1
    %s727 = scalar_lea.sflag [#allocation6], 1
    %728 = vsyncpa %s727, 1
    %729 = vsyncpa [#allocation4], 1
    %s730 = scalar_lea.sflag [#allocation4], 1
    %731 = vsyncpa %s730, 1
    %732 = vsyncpa [#allocation10], 1
    %s733 = scalar_lea.sflag [#allocation10], 1
    %734 = vsyncpa %s733, 1

</llo_original>
